<compile_context>
chip_gen: v7x
topology: tpu7x:2x2x1
jax: 0.10.0
libtpu: 0.0.40
codegen_flags: <defaults>
</compile_context>

<pallas_src>
import math

import jax
import jax.numpy as jnp
from jax import lax
from jax.experimental import pallas as pl
from jax.experimental.pallas import tpu as pltpu


def _round_up(x, m):
    return ((x + m - 1) // m) * m


def _cdiv(a, b):
    return (a + b - 1) // b


# ----------------------------- Pallas kernel ------------------------------ #
def _patch_embed_kernel(p_ref, w_ref, b_ref, g_ref, beta_ref, o_ref):
    # p_ref:    (TM, K)  bf16 im2col patch tile (pipelined over the 1-D grid)
    # w_ref:    (K, D)   bf16 conv weight, resident across the grid
    # b_ref, g_ref, beta_ref: (1, D) f32 conv bias / LN gamma / LN beta
    # o_ref:    (TM, D)  bf16 layer-normalized embeddings
    y = jnp.dot(p_ref[...], w_ref[...], preferred_element_type=jnp.float32)
    y = y + b_ref[...]                       # f32 epilogue throughout

    d = y.shape[-1]
    inv_d = 1.0 / d
    # One-pass LayerNorm statistics (two independent lane reductions).
    # Clamp var >= 0: E[x^2] - mean^2 can cancel slightly negative.
    s1 = jnp.sum(y, axis=-1, keepdims=True)
    s2 = jnp.sum(y * y, axis=-1, keepdims=True)
    mean = s1 * inv_d
    var = jnp.maximum(s2 * inv_d - mean * mean, 0.0)
    inv = lax.rsqrt(var + 1e-5)
    # Final cast to bf16 only at the store (halves output HBM traffic).
    o_ref[...] = ((y - mean) * inv * g_ref[...] + beta_ref[...]).astype(o_ref.dtype)


# --------------------------- tiling / VMEM policy -------------------------- #
def _vmem_limit_bytes():
    """Generation-keyed scoped-VMEM limit: 32 MiB on v7x (64 MiB physical),
    64 MiB on v5e/v6e (128 MiB physical)."""
    try:
        cap = pltpu.get_tpu_info().vmem_capacity_bytes
        if cap >= (100 << 20):
            return 64 << 20
    except Exception:
        pass
    return 32 << 20


def _choose_tm(M, max_tm=8192):
    """M-tile: as large as possible (amortize ~0.35 us/grid-step overhead),
    minimal padding, even tile count (>1) so both v7x TensorCores get work."""
    n = _cdiv(M, max_tm)
    if M >= 4096:
        n = max(n, 4)              # >= 2 tiles per TensorCore on v7x
    if n > 1 and n % 2 == 1:
        n += 1                     # balanced across the 2 TCs
    tm = _round_up(_cdiv(M, n), 16)  # 16: bf16 sublane packing; minimal pad
    return max(16, tm)


def _run_patch_embed_matmul_ln(patches_bf16, w_bf16, b, gamma, beta, max_tm=8192):
    """patches_bf16: (M, K) bf16; w_bf16: (K, D) bf16; b/gamma/beta: (1, D) f32."""
    M, K = patches_bf16.shape
    D = w_bf16.shape[1]

    TM = _choose_tm(M, max_tm)
    M_pad = _round_up(M, TM)
    if M_pad != M:
        patches_bf16 = jnp.pad(patches_bf16, ((0, M_pad - M), (0, 0)))
    n_tiles = M_pad // TM

    cost = pl.CostEstimate(
        flops=2 * M_pad * K * D,
        transcendentals=0,
        bytes_accessed=M_pad * K * 2 + K * D * 2 + M_pad * D * 2 + 3 * D * 4,
    )

    out = pl.pallas_call(
        _patch_embed_kernel,
        out_shape=jax.ShapeDtypeStruct((M_pad, D), jnp.bfloat16),
        grid=(n_tiles,),
        in_specs=[
            pl.BlockSpec((TM, K), lambda i: (i, 0)),   # pipelined patch tiles
            pl.BlockSpec((K, D), lambda i: (0, 0)),    # resident weight
            pl.BlockSpec((1, D), lambda i: (0, 0)),    # resident bias
            pl.BlockSpec((1, D), lambda i: (0, 0)),    # resident LN gamma
            pl.BlockSpec((1, D), lambda i: (0, 0)),    # resident LN beta
        ],
        out_specs=pl.BlockSpec((TM, D), lambda i: (i, 0)),
        compiler_params=pltpu.CompilerParams(
            dimension_semantics=("parallel",),          # shards M across TCs
            vmem_limit_bytes=_vmem_limit_bytes(),
            # Allow XLA to fuse the im2col slice/stack producer straight into
            # the patches operand instead of materializing it in HBM.
            allow_input_fusion=[True, False, False, False, False],
        ),
        cost_estimate=cost,
    )(patches_bf16, w_bf16, b, gamma, beta)

    return out[:M] if M_pad != M else out


# ------------------------------ JAX glue ---------------------------------- #
def _extract_patches_nhwc(x_nhwc, kh, kw, stride, pad):
    """im2col: (B, H, W, C) -> (B, Ho, Wo, kh*kw*C), flatten order (i, j, c).
    Kept as pure slices/stack/reshape so it is a clean operand-fusion
    candidate for the pallas_call (allow_input_fusion)."""
    x = jnp.pad(x_nhwc, ((0, 0), (pad, pad), (pad, pad), (0, 0)))
    B, Hp, Wp, C = x.shape
    Ho = (Hp - kh) // stride + 1
    Wo = (Wp - kw) // stride + 1
    pieces = []
    for i in range(kh):
        for j in range(kw):
            pieces.append(
                x[:, i : i + stride * Ho : stride, j : j + stride * Wo : stride, :]
            )
    patches = jnp.stack(pieces, axis=3)  # (B, Ho, Wo, kh*kw, C)
    return patches.reshape(B, Ho, Wo, kh * kw * C), Ho, Wo


class OverlapPatchEmbedPallas:
    def __init__(self, img_size=16, patch_size=7, stride=4, in_chans=4,
                 embed_dim=32, key=None, max_tm=8192):
        assert patch_size > stride, "Set larger patch_size than stride"
        self.patch_size = (patch_size, patch_size)
        self.stride = stride
        self.pad = patch_size // 2
        self.in_chans = in_chans
        self.embed_dim = embed_dim
        self.max_tm = max_tm
        self.H = img_size // stride
        self.W = img_size // stride

        key = jax.random.PRNGKey(0) if key is None else key
        kh, kw = self.patch_size
        # Conv2d init: weight ~ N(0, sqrt(2/fan_out)), fan_out = kh*kw*embed_dim
        fan_out = kh * kw * embed_dim
        std = math.sqrt(2.0 / fan_out)
        w_oihw = std * jax.random.normal(
            key, (embed_dim, in_chans, kh, kw), dtype=jnp.float32
        )
        # reshape to (kh*kw*Cin, D) matching im2col (i, j, c) flatten order
        self.w_mat = jnp.transpose(w_oihw, (2, 3, 1, 0)).reshape(
            kh * kw * in_chans, embed_dim
        )
        self.w_mat_bf16 = self.w_mat.astype(jnp.bfloat16)       # MXU input dtype
        self.b = jnp.zeros((1, embed_dim), jnp.float32)          # conv bias = 0
        self.ln_gamma = jnp.ones((1, embed_dim), jnp.float32)    # LN weight = 1
        self.ln_beta = jnp.zeros((1, embed_dim), jnp.float32)    # LN bias = 0

        # One jitted embed function reused for x and x1 (shared weights,
        # single compiled executable; no raw-image concatenation).
        self._embed_jit = jax.jit(self._embed_impl)

    def _embed_impl(self, x_nchw):
        kh, kw = self.patch_size
        # NCHW -> NHWC, cast to bf16 before im2col (halves input traffic).
        x_nhwc = jnp.transpose(x_nchw, (0, 2, 3, 1)).astype(jnp.bfloat16)
        patches, Ho, Wo = _extract_patches_nhwc(
            x_nhwc, kh, kw, self.stride, self.pad
        )
        B = patches.shape[0]
        patches_2d = patches.reshape(B * Ho * Wo, kh * kw * self.in_chans)
        out = _run_patch_embed_matmul_ln(
            patches_2d, self.w_mat_bf16, self.b, self.ln_gamma, self.ln_beta,
            max_tm=self.max_tm,
        )
        return out.reshape(B, Ho * Wo, self.embed_dim)

    def _out_hw(self, x_nchw):
        kh, kw = self.patch_size
        Ho = (x_nchw.shape[2] + 2 * self.pad - kh) // self.stride + 1
        Wo = (x_nchw.shape[3] + 2 * self.pad - kw) // self.stride + 1
        return Ho, Wo

    def __call__(self, x, x1):
        H, W = self._out_hw(x)
        x_emb = self._embed_jit(x)
        if x1 is not None:
            H, W = self._out_hw(x1)
            x1_emb = self._embed_jit(x1)   # second call, same executable
            return x_emb, H, W, x1_emb
        return x_emb, H, W, None


# ------------------------------ reference --------------------------------- #
def _reference(module, x_nchw):
    """Pure-JAX reference (conv + flatten + LayerNorm) on bf16-rounded inputs,
    matching the kernel's bf16-in / f32-accumulate numerics (f32 output)."""
    kh, kw = module.patch_size
    x = x_nchw.astype(jnp.bfloat16).astype(jnp.float32)
    w_oihw = jnp.transpose(
        module.w_mat_bf16.astype(jnp.float32).reshape(
            kh, kw, module.in_chans, module.embed_dim
        ),
        (3, 2, 0, 1),
    )
    y = lax.conv_general_dilated(
        x, w_oihw,
        window_strides=(module.stride, module.stride),
        padding=[(module.pad, module.pad), (module.pad, module.pad)],
        dimension_numbers=("NCHW", "OIHW", "NCHW"),
    )
    y = y + module.b.reshape(1, module.embed_dim, 1, 1)
    B, D, H, W = y.shape
    y = y.reshape(B, D, H * W).transpose(0, 2, 1)  # (B, HW, D)
    mean = jnp.mean(y, axis=-1, keepdims=True)
    var = jnp.mean((y - mean) ** 2, axis=-1, keepdims=True)
    y_n = (y - mean) / jnp.sqrt(var + 1e-5)
    return y_n * module.ln_gamma.reshape(1, 1, D) + module.ln_beta.reshape(1, 1, D)


if __name__ == "__main__":
    key = jax.random.PRNGKey(0)
    k_w, k_x, k_x1 = jax.random.split(key, 3)

    B, C, S = 2, 4, 16
    embed_dim = 32
    module = OverlapPatchEmbedPallas(
        img_size=S, patch_size=7, stride=4, in_chans=C, embed_dim=embed_dim, key=k_w
    )

    x = jax.random.normal(k_x, (B, C, S, S), dtype=jnp.float32)
    x1 = jax.random.normal(k_x1, (B, C, S, S), dtype=jnp.float32)

    x_emb, H, W, x1_emb = module(x, x1)
    jax.block_until_ready(x_emb)
    jax.block_until_ready(x1_emb)

    assert x_emb.shape == (B, H * W, embed_dim), x_emb.shape
    assert x1_emb.shape == (B, H * W, embed_dim), x1_emb.shape
    assert (H, W) == (S // 4, S // 4)
    assert x_emb.dtype == jnp.bfloat16

    # Kernel output is bf16 (perf review); compare against the bf16-rounded
    # f32 reference with a tolerance that covers the 1-ulp rounding delta.
    ref = _reference(module, x)
    ref1 = _reference(module, x1)
    ref_bf = ref.astype(jnp.bfloat16).astype(jnp.float32)
    ref1_bf = ref1.astype(jnp.bfloat16).astype(jnp.float32)
    out = x_emb.astype(jnp.float32)
    out1 = x1_emb.astype(jnp.float32)
    err = max(float(jnp.max(jnp.abs(out - ref_bf))),
              float(jnp.max(jnp.abs(out1 - ref1_bf))))
    assert jnp.allclose(out, ref_bf, atol=3e-2, rtol=3e-2), err
    assert jnp.allclose(out1, ref1_bf, atol=3e-2, rtol=3e-2), err

    # x1=None path (spec allows it)
    x_only, H2, W2, none_out = module(x, None)
    jax.block_until_ready(x_only)
    assert none_out is None and (H2, W2) == (H, W)
    assert jnp.allclose(x_only.astype(jnp.float32), ref_bf, atol=3e-2, rtol=3e-2)

    print("KERNEL_OK")
</pallas_src>

<mosaic_0001>
module attributes {stable_mosaic.version = 11 : i64} {
  func.func @_patch_embed_kernel(%arg0: i32, %arg1: memref<32x196xbf16, #tpu.memory_space<vmem>>, %arg2: memref<196x32xbf16, #tpu.memory_space<vmem>>, %arg3: memref<1x32xf32, #tpu.memory_space<vmem>>, %arg4: memref<1x32xf32, #tpu.memory_space<vmem>>, %arg5: memref<1x32xf32, #tpu.memory_space<vmem>>, %arg6: memref<32x32xbf16, #tpu.memory_space<vmem>>) attributes {dimension_semantics = [#tpu.dimension_semantics<parallel>], iteration_bounds = array<i64: 1>, scalar_prefetch = 0 : i64, scratch_operands = 0 : i64, tpu.core_type = #tpu.core_type<tc>, window_params = [{transform_indices = @transform_0, window_bounds = array<i64: 32, 196>}, {pipeline_mode = #tpu.pipeline_mode<synchronous>, transform_indices = @transform_1, window_bounds = array<i64: 196, 32>}, {pipeline_mode = #tpu.pipeline_mode<synchronous>, transform_indices = @transform_2, window_bounds = array<i64: 1, 32>}, {pipeline_mode = #tpu.pipeline_mode<synchronous>, transform_indices = @transform_3, window_bounds = array<i64: 1, 32>}, {pipeline_mode = #tpu.pipeline_mode<synchronous>, transform_indices = @transform_4, window_bounds = array<i64: 1, 32>}, {transform_indices = @transform_5, window_bounds = array<i64: 32, 32>}]} {
    %c0 = arith.constant 0 : index
    %c0_0 = arith.constant 0 : index
    %0 = vector.load %arg1[%c0, %c0_0] : memref<32x196xbf16, #tpu.memory_space<vmem>>, vector<32x196xbf16>
    %c0_1 = arith.constant 0 : index
    %c0_2 = arith.constant 0 : index
    %1 = vector.load %arg2[%c0_1, %c0_2] : memref<196x32xbf16, #tpu.memory_space<vmem>>, vector<196x32xbf16>
    %cst = arith.constant dense<0.000000e+00> : vector<32x32xf32>
    %2 = tpu.matmul %0, %1, %cst {dimension_numbers = #tpu.dot_dimension_numbers<[1], [0], [0], [1], [0, 0, 1, 1], [], []>} : vector<32x196xbf16>, vector<196x32xbf16>, vector<32x32xf32> -> vector<32x32xf32>
    %c0_3 = arith.constant 0 : index
    %c0_4 = arith.constant 0 : index
    %3 = vector.load %arg3[%c0_3, %c0_4] : memref<1x32xf32, #tpu.memory_space<vmem>>, vector<1x32xf32>
    %4 = vector.broadcast %3 : vector<1x32xf32> to vector<32x32xf32>
    %5 = arith.addf %2, %4 : vector<32x32xf32>
    %cst_5 = arith.constant dense<0.000000e+00> : vector<32xf32>
    %6 = vector.multi_reduction <add>, %5, %cst_5 [1] : vector<32x32xf32> to vector<32xf32>
    %7 = vector.shape_cast %6 : vector<32xf32> to vector<32x1xf32>
    %8 = arith.mulf %5, %5 : vector<32x32xf32>
    %cst_6 = arith.constant dense<0.000000e+00> : vector<32xf32>
    %9 = vector.multi_reduction <add>, %8, %cst_6 [1] : vector<32x32xf32> to vector<32xf32>
    %10 = vector.shape_cast %9 : vector<32xf32> to vector<32x1xf32>
    %cst_7 = arith.constant 3.125000e-02 : f32
    %11 = vector.broadcast %cst_7 : f32 to vector<32x1xf32>
    %12 = arith.mulf %7, %11 : vector<32x1xf32>
    %cst_8 = arith.constant 3.125000e-02 : f32
    %13 = vector.broadcast %cst_8 : f32 to vector<32x1xf32>
    %14 = arith.mulf %10, %13 : vector<32x1xf32>
    %15 = arith.mulf %12, %12 : vector<32x1xf32>
    %16 = arith.subf %14, %15 : vector<32x1xf32>
    %cst_9 = arith.constant 0.000000e+00 : f32
    %17 = vector.broadcast %cst_9 : f32 to vector<32x1xf32>
    %18 = arith.maximumf %16, %17 : vector<32x1xf32>
    %cst_10 = arith.constant 9.99999974E-6 : f32
    %19 = vector.broadcast %cst_10 : f32 to vector<32x1xf32>
    %20 = arith.addf %18, %19 : vector<32x1xf32>
    %21 = math.rsqrt %20 : vector<32x1xf32>
    %22 = vector.broadcast %12 : vector<32x1xf32> to vector<32x32xf32>
    %23 = arith.subf %5, %22 : vector<32x32xf32>
    %24 = vector.broadcast %21 : vector<32x1xf32> to vector<32x32xf32>
    %25 = arith.mulf %23, %24 : vector<32x32xf32>
    %c0_11 = arith.constant 0 : index
    %c0_12 = arith.constant 0 : index
    %26 = vector.load %arg4[%c0_11, %c0_12] : memref<1x32xf32, #tpu.memory_space<vmem>>, vector<1x32xf32>
    %27 = vector.broadcast %26 : vector<1x32xf32> to vector<32x32xf32>
    %28 = arith.mulf %25, %27 : vector<32x32xf32>
    %c0_13 = arith.constant 0 : index
    %c0_14 = arith.constant 0 : index
    %29 = vector.load %arg5[%c0_13, %c0_14] : memref<1x32xf32, #tpu.memory_space<vmem>>, vector<1x32xf32>
    %30 = vector.broadcast %29 : vector<1x32xf32> to vector<32x32xf32>
    %31 = arith.addf %28, %30 : vector<32x32xf32>
    %32 = arith.truncf %31 : vector<32x32xf32> to vector<32x32xbf16>
    %c0_15 = arith.constant 0 : index
    %c0_16 = arith.constant 0 : index
    %33 = vector.load %arg6[%c0_15, %c0_16] : memref<32x32xbf16, #tpu.memory_space<vmem>>, vector<32x32xbf16>
    tpu.vector_store %arg6[%c0_15, %c0_16], %32 {strides = array<i32>} : memref<32x32xbf16, #tpu.memory_space<vmem>>, vector<32x32xbf16>,
    return
  }
  func.func @transform_0(%arg0: i32) -> (i32, i32) {
    %c0_i32 = arith.constant 0 : i32
    %c0_i32_0 = arith.constant 0 : i32
    return %arg0, %c0_i32 : i32, i32
  }
  func.func @transform_1(%arg0: i32) -> (i32, i32) {
    %c0_i32 = arith.constant 0 : i32
    %c0_i32_0 = arith.constant 0 : i32
    %c0_i32_1 = arith.constant 0 : i32
    return %c0_i32, %c0_i32_0 : i32, i32
  }
  func.func @transform_2(%arg0: i32) -> (i32, i32) {
    %c0_i32 = arith.constant 0 : i32
    %c0_i32_0 = arith.constant 0 : i32
    %c0_i32_1 = arith.constant 0 : i32
    return %c0_i32, %c0_i32_0 : i32, i32
  }
  func.func @transform_3(%arg0: i32) -> (i32, i32) {
    %c0_i32 = arith.constant 0 : i32
    %c0_i32_0 = arith.constant 0 : i32
    %c0_i32_1 = arith.constant 0 : i32
    return %c0_i32, %c0_i32_0 : i32, i32
  }
  func.func @transform_4(%arg0: i32) -> (i32, i32) {
    %c0_i32 = arith.constant 0 : i32
    %c0_i32_0 = arith.constant 0 : i32
    %c0_i32_1 = arith.constant 0 : i32
    return %c0_i32, %c0_i32_0 : i32, i32
  }
  func.func @transform_5(%arg0: i32) -> (i32, i32) {
    %c0_i32 = arith.constant 0 : i32
    %c0_i32_0 = arith.constant 0 : i32
    return %arg0, %c0_i32 : i32, i32
  }
}

</mosaic_0001>

<llo_original>
// kernel: _embed_impl.1
$region0: #{_embed_impl.1}
  #allocation0 [shape = 'u32[]', space=smem, size = 0x4, offset = 0x4, fixed_abs, tag = 'smem constant byte address 0x4 - core index']
  #allocation1 [shape = 'u32[144,128]{1,0:T(1,128)}', space=vmem, size = 0x12000, scoped, tag = 'internal scratch']
  %s0 = inlined_call_operand.vmem [shape: bf16[32,196], index: 0, kind: input, shape index: {}]
  %s1 = inlined_call_operand.vmem [shape: bf16[196,32], index: 1, kind: input, shape index: {}]
  %s2 = inlined_call_operand.vmem [shape: f32[1,32], index: 2, kind: input, shape index: {}, may-alias: {2,4}]
  %s3 = inlined_call_operand.vmem [shape: f32[1,32], index: 3, kind: input, shape index: {}]
  %s4 = inlined_call_operand.vmem [shape: f32[1,32], index: 4, kind: input, shape index: {}, may-alias: {2,4}]
  %s5 = inlined_call_operand.hbm [shape: bf16[32,32], index: 5, kind: output, shape index: {}]
  %s6 = sld [smem:[#allocation0]]
  $region30: #{_embed_impl.1} parent=0
    _
  %s8 = ssub.s32 1, %s6
  %s9 = scalar_select 0, %s8, %s6
  $region1: #{_embed_impl.1} parent=0
    #allocation2 [shape = 'u8[8192]{0}', space=vmem, size = 0x2000, scoped, tag = 'output window, operand 0, single buffered']
    #allocation3 [shape = 's32[1]{0}', space=sflag, size = 0x4, scoped, tag = 'scoped memory for _embed_impl.1']
    %10 = vsyncpa [#allocation3], 0
    // Predicated region
    $region2: #{_embed_impl.1} parent=1 // pred_check
      _
    $region3: #{_embed_impl.1} parent=1 // pred_check_branch
      %12 = sbr.rel (0) target = $region5
    $region4: #{_embed_impl.1} parent=1 // pred_region
      _
    $region5: #{_embed_impl.1} parent=1 // pred_fallthru
      _
    // Predicated region
    $region6: #{_embed_impl.1} parent=1 // pred_check
      _
    $region7: #{_embed_impl.1} parent=1 // pred_check_branch
      %14 = sbr.rel (0) target = $region9
    $region8: #{_embed_impl.1} parent=1 // pred_region
      _
    $region9: #{_embed_impl.1} parent=1 // pred_fallthru
      _
    // Predicated region
    $region10: #{_embed_impl.1} parent=1 // pred_check
      _
    $region11: #{_embed_impl.1} parent=1 // pred_check_branch
      %16 = sbr.rel (0) target = $region13
    $region12: #{_embed_impl.1} parent=1 // pred_region
      _
    $region13: #{_embed_impl.1} parent=1 // pred_fallthru
      _
    // Predicated region
    $region14: #{_embed_impl.1} parent=1 // pred_check
      _
    $region15: #{_embed_impl.1} parent=1 // pred_check_branch
      %18 = sbr.rel (0) target = $region17
    $region16: #{_embed_impl.1} parent=1 // pred_region
      _
    $region17: #{_embed_impl.1} parent=1 // pred_fallthru
      _
    // Predicated region
    $region18: #{_embed_impl.1} parent=1 // pred_check
      _
    $region19: #{_embed_impl.1} parent=1 // pred_check_branch
      %20 = sbr.rel (0) target = $region21
    $region20: #{_embed_impl.1} parent=1 // pred_region
      _
    $region21: #{_embed_impl.1} parent=1 // pred_fallthru
      _
    %v22 = vld [vmem:[%s0] sm:$0xff]
    %v23 = vld [vmem:[%s0 + $0x8] sm:$0xff]
    %v24 = vld [vmem:[%s0 + $0x10] sm:$0xff]
    %v25 = vld [vmem:[%s0 + $0x18] sm:$0xff]
    %v26 = vld [vmem:[%s1] sm:$0xf]
    %v27 = vld [vmem:[%s1 + $0x4] sm:$0xf]
    %v28 = vld [vmem:[%s1 + $0x8] sm:$0xf]
    %v29 = vld [vmem:[%s1 + $0xc] sm:$0xf]
    %v30 = vld [vmem:[%s1 + $0x10] sm:$0xf]
    %v31 = vld [vmem:[%s1 + $0x14] sm:$0xf]
    %v32 = vld [vmem:[%s1 + $0x18] sm:$0xf]
    %v33 = vld [vmem:[%s1 + $0x1c] sm:$0xf]
    %v34 = vld [vmem:[%s1 + $0x20] sm:$0xf]
    %v35 = vld [vmem:[%s1 + $0x24] sm:$0xf]
    %v36 = vld [vmem:[%s1 + $0x28] sm:$0xf]
    %v37 = vld [vmem:[%s1 + $0x2c] sm:$0xf]
    %v38 = vld [vmem:[%s1 + $0x30] sm:$0xf]
    %v39 = vld [vmem:[%s1 + $0x34] sm:$0xf]
    %v40 = vld [vmem:[%s1 + $0x38] sm:$0xf]
    %v41 = vld [vmem:[%s1 + $0x3c] sm:$0xf]
    %v42 = vld [vmem:[%s1 + $0x40] sm:$0xf]
    %v43 = vld [vmem:[%s1 + $0x44] sm:$0xf]
    %v44 = vld [vmem:[%s1 + $0x48] sm:$0xf]
    %v45 = vld [vmem:[%s1 + $0x4c] sm:$0xf]
    %v46 = vld [vmem:[%s1 + $0x50] sm:$0xf]
    %v47 = vld [vmem:[%s1 + $0x54] sm:$0xf]
    %v48 = vld [vmem:[%s1 + $0x58] sm:$0xf]
    %v49 = vld [vmem:[%s1 + $0x5c] sm:$0xf]
    %v50 = vld [vmem:[%s1 + $0x60] sm:$0x3]
    %v51 = vld [vmem:[%s2] sm:$0x1]
    %v53 = vlaneseq
    %v54 = vshrl.u32 %v53, 7
    %v55 = vsub.s32 0, %v54
    %v56 = vrot.slane %v51, %v55
    %v62 = vunpack.c.l.b16 %v22
    %v63 = vunpack.c.h.b16 %v22
    %v64 = vunpack.c.l.b16 %v23
    %v65 = vunpack.c.h.b16 %v23
    %v66 = vunpack.c.l.b16 %v24
    %v67 = vunpack.c.h.b16 %v24
    %v68 = vunpack.c.l.b16 %v25
    %v69 = vunpack.c.h.b16 %v25
    %v70 = vpack.c.b16 %v64, %v62
    %v71 = vpack.c.b16 %v65, %v63
    %v72 = vpack.c.b16 %v68, %v66
    %v73 = vpack.c.b16 %v69, %v67
    %v101 = vunpack.c.l.b16 %v26
    %v102 = vunpack.c.l.b16 %v27
    %v103 = vunpack.c.l.b16 %v28
    %v104 = vunpack.c.l.b16 %v29
    %v105 = vunpack.c.l.b16 %v30
    %v106 = vunpack.c.l.b16 %v31
    %v107 = vunpack.c.l.b16 %v32
    %v108 = vunpack.c.l.b16 %v33
    %v109 = vunpack.c.l.b16 %v34
    %v110 = vunpack.c.l.b16 %v35
    %v111 = vunpack.c.l.b16 %v36
    %v112 = vunpack.c.l.b16 %v37
    %v113 = vunpack.c.l.b16 %v38
    %v114 = vunpack.c.l.b16 %v39
    %v115 = vunpack.c.l.b16 %v40
    %v116 = vunpack.c.l.b16 %v41
    %v117 = vunpack.c.l.b16 %v42
    %v118 = vunpack.c.l.b16 %v43
    %v119 = vunpack.c.l.b16 %v44
    %v120 = vunpack.c.l.b16 %v45
    %v121 = vunpack.c.l.b16 %v46
    %v122 = vunpack.c.l.b16 %v47
    %v123 = vunpack.c.l.b16 %v48
    %v124 = vunpack.c.l.b16 %v49
    %v125 = vunpack.c.l.b16 %v50
    %v126 = vpack.c.b16 %v102, %v101
    %v127 = vpack.c.b16 %v104, %v103
    %v128 = vpack.c.b16 %v106, %v105
    %v129 = vpack.c.b16 %v108, %v107
    %v130 = vpack.c.b16 %v110, %v109
    %v131 = vpack.c.b16 %v112, %v111
    %v132 = vpack.c.b16 %v114, %v113
    %v133 = vpack.c.b16 %v116, %v115
    %v134 = vpack.c.b16 %v118, %v117
    %v135 = vpack.c.b16 %v120, %v119
    %v136 = vpack.c.b16 %v122, %v121
    %v137 = vpack.c.b16 %v124, %v123
    %v138 = vpack.c.b16 %v125, %v125
    %vm151 = vcmask 556032
    %v153 = vsel %vm151, %v71, 0
    %v156 = vsel %vm151, %v73, 0
    %vm158 = vcmask 1041408
    %v160 = vsel %vm158, %v138, 0
    %162 = vmatprep.subr.bf16.mxu0 0
    %163 = vmatpush1.bf16.msra.mxu0 %v126
    %164 = vmatprep.subr.bf16.mxu0 0
    %165 = vmatpush1.bf16.msra.mxu0 %v127
    %166 = vmatprep.subr.bf16.mxu0 0
    %167 = vmatpush1.bf16.msra.mxu0 %v128
    %168 = vmatprep.subr.bf16.mxu0 0
    %169 = vmatpush1.bf16.msra.mxu0 %v129
    %170 = vmatprep.subr.bf16.mxu0 0
    %171 = vmatpush1.bf16.msra.mxu0 %v130
    %172 = vmatprep.subr.bf16.mxu0 0
    %173 = vmatpush1.bf16.msra.mxu0 %v131
    %174 = vmatprep.subr.bf16.mxu0 0
    %175 = vmatpush1.bf16.msra.mxu0 %v132
    %176 = vmatprep.subr.bf16.mxu0 0
    %177 = vmatpush1.bf16.msra.mxu0 %v133
    %178 = vmatprep.subr.bf16.mxu0 0
    %179 = vmatpush1.bf16.msra.mxu0 %v134
    %180 = vmatprep.subr.bf16.mxu0 0
    %181 = vmatpush1.bf16.msra.mxu0 %v135
    %182 = vmatprep.subr.bf16.mxu0 0
    %183 = vmatpush1.bf16.msra.mxu0 %v136
    %184 = vmatprep.subr.bf16.mxu0 0
    %185 = vmatpush1.bf16.msra.mxu0 %v137
    %186 = vmatprep.subr.bf16.mxu0 0
    %187 = vmatpush1.bf16.msra.mxu0 %v160
    %188 = vmatprep.subr.bf16.mxu0 0
    %189 = vmatpush1.bf16.msra.mxu0 0
    %190 = vmatprep.subr.bf16.mxu0 0
    %191 = vmatpush1.bf16.msra.mxu0 0
    %192 = vmatprep.subr.bf16.mxu0 0
    %193 = vmatpush1.bf16.msra.mxu0 0
    %194 = vmatprep.mubr.bf16.mxu0 %v153
    %195 = vmatmul.mubr.bf16.gmra.mrb[0].mxu0 %v70
    %v196 = vpop.f32.mrb[0].mxu0
    %v197 = vadd.f32 %v56, %v196
    %v198 = vpop.f32.mrb[0].mxu0
    %v199 = vpop.f32.mrb[0].mxu0
    %v200 = vadd.f32 %v56, %v199
    %v201 = vpop.f32.mrb[0].mxu0
    %202 = vmatprep.mubr.bf16.mxu0 %v156
    %203 = vmatmul.mubr.bf16.gmra.mrb[0].mxu0 %v72
    %v204 = vpop.f32.mrb[0].mxu0
    %v205 = vadd.f32 %v56, %v204
    %v206 = vpop.f32.mrb[0].mxu0
    %v207 = vpop.f32.mrb[0].mxu0
    %v208 = vadd.f32 %v56, %v207
    %v209 = vpop.f32.mrb[0].mxu0
    %210 = vdwg.mxu0
    %vm211 = vcmask 261120
    %v212 = vsel %vm211, %v197, 0.0
    %213 = vadd.xlane.f32.xlu0 %v212
    %v214 = vpop.xlane.xlu0 %213
    %v215 = vsel %vm211, %v200, 0.0
    %216 = vadd.xlane.f32.xlu0 %v215
    %v217 = vpop.xlane.xlu0 %216
    %v218 = vsel %vm211, %v205, 0.0
    %219 = vadd.xlane.f32.xlu0 %v218
    %v220 = vpop.xlane.xlu0 %219
    %v221 = vsel %vm211, %v208, 0.0
    %222 = vadd.xlane.f32.xlu0 %v221
    %v223 = vpop.xlane.xlu0 %222
    %v224 = vmul.f32 %v197, %v197
    %v225 = vmul.f32 %v200, %v200
    %v226 = vmul.f32 %v205, %v205
    %v227 = vmul.f32 %v208, %v208
    %v228 = vsel %vm211, %v224, 0.0
    %229 = vadd.xlane.f32.xlu0 %v228
    %v230 = vpop.xlane.xlu0 %229
    %v231 = vsel %vm211, %v225, 0.0
    %232 = vadd.xlane.f32.xlu0 %v231
    %v233 = vpop.xlane.xlu0 %232
    %v234 = vsel %vm211, %v226, 0.0
    %235 = vadd.xlane.f32.xlu0 %v234
    %v236 = vpop.xlane.xlu0 %235
    %v237 = vsel %vm211, %v227, 0.0
    %238 = vadd.xlane.f32.xlu0 %v237
    %v239 = vpop.xlane.xlu0 %238
    %v240 = vmul.f32 %v214, 0.03125
    %v241 = vmul.f32 %v217, 0.03125
    %v242 = vmul.f32 %v220, 0.03125
    %v243 = vmul.f32 %v223, 0.03125
    %v244 = vmul.f32 %v230, 0.03125
    %v245 = vmul.f32 %v233, 0.03125
    %v246 = vmul.f32 %v236, 0.03125
    %v247 = vmul.f32 %v239, 0.03125
    %v248 = vmul.f32 %v240, %v240
    %v249 = vmul.f32 %v241, %v241
    %v250 = vmul.f32 %v242, %v242
    %v251 = vmul.f32 %v243, %v243
    %v252 = vsub.f32 %v244, %v248
    %v253 = vsub.f32 %v245, %v249
    %v254 = vsub.f32 %v246, %v250
    %v255 = vsub.f32 %v247, %v251
    %v256 = vmax.f32 %v252, 0.0
    %v257 = vmax.f32 %v253, 0.0
    %v258 = vmax.f32 %v254, 0.0
    %v259 = vmax.f32 %v255, 0.0
    %v260 = vadd.f32 %v256, 1e-05
    %v261 = vadd.f32 %v257, 1e-05
    %v262 = vadd.f32 %v258, 1e-05
    %v263 = vadd.f32 %v259, 1e-05
    %v264 = vrsqrt.pop %v260
    %v265 = vrsqrt.pop %v261
    %v266 = vrsqrt.pop %v262
    %v267 = vrsqrt.pop %v263
    %v268 = vsub.f32 %v197, %v240
    %v269 = vsub.f32 %v200, %v241
    %v270 = vsub.f32 %v205, %v242
    %v271 = vsub.f32 %v208, %v243
    %v272 = vmul.f32 %v268, %v264
    %v273 = vmul.f32 %v269, %v265
    %v274 = vmul.f32 %v270, %v266
    %v275 = vmul.f32 %v271, %v267
    %v276 = vld [vmem:[%s3] sm:$0x1]
    %v278 = vlaneseq
    %v279 = vshrl.u32 %v278, 7
    %v280 = vsub.s32 0, %v279
    %v281 = vrot.slane %v276, %v280
    %v283 = vmul.f32 %v272, %v281
    %v284 = vmul.f32 %v273, %v281
    %v285 = vmul.f32 %v274, %v281
    %v286 = vmul.f32 %v275, %v281
    %v287 = vld [vmem:[%s4] sm:$0x1]
    %v289 = vlaneseq
    %v290 = vshrl.u32 %v289, 7
    %v291 = vsub.s32 0, %v290
    %v292 = vrot.slane %v287, %v291
    %v294 = vadd.f32 %v283, %v292
    %v295 = vadd.f32 %v284, %v292
    %v296 = vadd.f32 %v285, %v292
    %v297 = vadd.f32 %v286, %v292
    %v298 = vpack.c.bf16 %v295, %v294
    %v299 = vpack.c.bf16 %v297, %v296
    %v302 = vunpack.c.l.b16 %v298
    %v303 = vunpack.c.h.b16 %v298
    %v304 = vunpack.c.l.b16 %v299
    %v305 = vunpack.c.h.b16 %v299
    %v306 = vpack.c.b16 %v302, %v302
    %v307 = vpack.c.b16 %v303, %v303
    %v308 = vpack.c.b16 %v304, %v304
    %v309 = vpack.c.b16 %v305, %v305
    %vm314 = vcmask 257024
    %315 = vst.msk [vmem:[#allocation2] sm:$0xf] %vm314, %v306
    %316 = vst.msk [vmem:[#allocation2 + $0x4] sm:$0xf] %vm314, %v307
    %317 = vst.msk [vmem:[#allocation2 + $0x8] sm:$0xf] %vm314, %v308
    %318 = vst.msk [vmem:[#allocation2 + $0xc] sm:$0xf] %vm314, %v309
    // Predicated region
    $region22: #{_embed_impl.1} parent=1 // pred_check
      _
    $region23: #{_embed_impl.1} parent=1 // pred_check_branch
      %320 = sbr.rel (0) target = $region25
    $region24: #{_embed_impl.1} parent=1 // pred_region
      %s322 = ssub.s32 256, 256
      %323 = vsyncadd [#allocation3], %s322
      %s324 = sshll.u32 [#allocation2], 4
      %s325 = int_to_ptr.vmem [resolvable:$true] %s324
      %330 = dma.vmem_to_hbm [thread:$0]  %s325, 256, %s5, [#allocation3], 64, 64, 4
    $region25: #{_embed_impl.1} parent=1 // pred_fallthru
      _
    // Predicated region
    $region26: #{_embed_impl.1} parent=1 // pred_check
      _
    $region27: #{_embed_impl.1} parent=1 // pred_check_branch
      %332 = sbr.rel (0) target = $region29
    $region28: #{_embed_impl.1} parent=1 // pred_region
      %333 = dma.done [#allocation3], 256
    $region29: #{_embed_impl.1} parent=1 // pred_fallthru
      _
    %334 = vsyncpa [#allocation3], 1

</llo_original>
